<compile_context>
chip_gen: v6e
topology: v6e:2x2x1
jax: 0.10.0
libtpu: 0.0.40
codegen_flags: <defaults>
</compile_context>

<pallas_src>
import jax
import jax.numpy as jnp
from jax.experimental import pallas as pl
from jax.experimental.pallas import tpu as pltpu

LANE = 128
ROW_ALIGN = 32                 # int8 packs 4 rows / sublane -> keep default tiles 32-aligned
TARGET_BLOCK_BYTES = 1 << 20   # ~1 MiB per input per block


def _cdiv(a, b):
    return (a + b - 1) // b


def _canonicalize(x):
    """Flatten and cast to a TPU-friendly integer dtype, keeping narrow data narrow."""
    x = jnp.asarray(x).reshape(-1)
    if x.dtype in (jnp.int8, jnp.uint8, jnp.bool_):
        return x.astype(jnp.int8)
    # Wider ints stay 32-bit (no wrapper-side down-cast pass over HBM); floats
    # are assumed to already hold exact 0/1 values (reference-loop invariant).
    return x.astype(jnp.int32)


def _make_cm_kernel(rows, tile_rows):
    """Build the per-block partial-sum kernel (closes over static shape info)."""
    ragged_rows = rows % tile_rows   # valid rows in the last block; 0 => all blocks full

    def _emit(y, p, out_ref):
        # 0/1 invariant: TP count per lane == sum(y & p); AND stays in the
        # narrow input dtype, widen once inside each sublane reduction.
        yp = y & p
        out_ref[0:1, :] = jnp.sum(y.astype(jnp.int32), axis=0, keepdims=True)
        out_ref[1:2, :] = jnp.sum(p.astype(jnp.int32), axis=0, keepdims=True)
        out_ref[2:3, :] = jnp.sum(yp.astype(jnp.int32), axis=0, keepdims=True)

    def kernel(y_ref, p_ref, out_ref):
        # y_ref / p_ref : (tile_rows, 128) integer blocks (0/1 values).
        # out_ref       : (3, 128) int32 partials for this block:
        #                 [per-lane sum(y), per-lane sum(p), per-lane sum(y&p)].
        y = y_ref[...]
        p = p_ref[...]
        if ragged_rows == 0:
            _emit(y, p, out_ref)
        else:
            i = pl.program_id(0)
            last = pl.num_programs(0) - 1

            @pl.when(i != last)
            def _full():
                _emit(y, p, out_ref)

            @pl.when(i == last)
            def _partial():
                # Only the last block is ragged: rows beyond `rows` hold
                # unspecified data from the boundary DMA -> mask them out.
                valid = jax.lax.broadcasted_iota(jnp.int32, y.shape, 0) < ragged_rows
                zero = jnp.zeros((), y.dtype)
                _emit(jnp.where(valid, y, zero), jnp.where(valid, p, zero), out_ref)

    return kernel


def _calc_tp_fp_tn_fn_pallas(labels, preds, *, max_tile_rows=None):
    y = _canonicalize(labels)
    p = _canonicalize(preds)
    if y.dtype != p.dtype:
        y = y.astype(jnp.int32)
        p = p.astype(jnp.int32)

    n = int(y.shape[0])
    if n == 0:
        zero = jnp.int32(0)
        return {"TP": zero, "FP": zero, "TN": zero, "FN": zero}

    # Pad only up to the next lane multiple (needed for the (rows, 128) view).
    # Ragged row-blocks are masked inside the kernel instead of over-padding
    # to a tile multiple.
    # TODO(synk): a fully pad-free path for N % 128 != 0 would need 1-D blocks
    # with in-kernel element masking.
    rem = n % LANE
    if rem:
        pad = LANE - rem
        y = jnp.pad(y, (0, pad))   # zeros never perturb sum(y)/sum(p)/sum(y&p)
        p = jnp.pad(p, (0, pad))
    rows = _cdiv(n, LANE)
    y2 = y.reshape(rows, LANE)
    p2 = p.reshape(rows, LANE)

    itemsize = y2.dtype.itemsize   # 1 (int8) or 4 (int32)
    cap = max(ROW_ALIGN,
              (TARGET_BLOCK_BYTES // (LANE * itemsize)) // ROW_ALIGN * ROW_ALIGN)
    if max_tile_rows is not None:
        cap = min(cap, max(int(max_tile_rows), 8))
    if rows <= cap:
        tile_rows = rows                     # single full-extent block (any row count ok)
        nb = 1
    else:
        tile_rows = max(8, (cap // 8) * 8)   # keep the (8, 128) divisibility rule
        nb = _cdiv(rows, tile_rows)

    partials = pl.pallas_call(
        _make_cm_kernel(rows, tile_rows),
        out_shape=jax.ShapeDtypeStruct((nb, 3, LANE), jnp.int32),
        grid=(nb,),
        in_specs=[
            pl.BlockSpec((tile_rows, LANE), lambda i: (i, 0)),   # labels
            pl.BlockSpec((tile_rows, LANE), lambda i: (i, 0)),   # preds
        ],
        out_specs=pl.BlockSpec((None, 3, LANE), lambda i: (i, 0, 0)),
        compiler_params=pltpu.CompilerParams(
            dimension_semantics=("parallel",)),
    )(y2, p2)

    # Tiny epilogue: fold blocks + lanes once, then the confusion-matrix algebra.
    sums = jnp.sum(partials, axis=(0, 2))   # (3,) int32: [sum(y), sum(p), sum(y&p)]
    s_y, s_p, tp = sums[0], sums[1], sums[2]
    n32 = jnp.int32(n)
    return {"TP": tp, "FP": s_p - tp, "TN": n32 - s_y - s_p + tp, "FN": s_y - tp}


def _calc_tp_fp_tn_fn_jax(labels, preds):
    """Pure-JAX fallback for metric-sized inputs (launch overhead dominates)."""
    y = jnp.asarray(labels).reshape(-1).astype(jnp.int32)
    p = jnp.asarray(preds).reshape(-1).astype(jnp.int32)
    n = jnp.int32(y.shape[0])
    s_y = jnp.sum(y)
    s_p = jnp.sum(p)
    tp = jnp.sum(y * p)
    return {"TP": tp, "FP": s_p - tp, "TN": n - s_y - s_p + tp, "FN": s_y - tp}


def calc_tp_fp_tn_fn_for_single_class(labels, preds, *,
                                      min_pallas_elements=1 << 16,
                                      max_tile_rows=None):
    """Confusion-matrix counts for one binary class (0/1 labels & preds)."""
    n = int(jnp.asarray(labels).size)
    if n < min_pallas_elements:
        return _calc_tp_fp_tn_fn_jax(labels, preds)
    return _calc_tp_fp_tn_fn_pallas(labels, preds, max_tile_rows=max_tile_rows)


class DatanodeCMMetricPallas:
    """Pallas analogue of DatanodeCMMetric (binary confusion-matrix counts).

    The original forward walks a datanode graph (needsBatchRootDN / getDataNode
    / getInferMetrics) to fetch `labels` / `preds`; that bookkeeping has no
    tensor semantics and is not a kernel.  The caller supplies labels / preds
    directly and the binary branch (calc_TP_FP_TN_FN_for_single_class) runs
    here.
    """

    def __init__(self, inferType="ILP", *, min_pallas_elements=1 << 16,
                 max_tile_rows=None):
        self.inferType = inferType
        self.min_pallas_elements = min_pallas_elements
        self.max_tile_rows = max_tile_rows

    def forward(self, labels, preds):
        # TODO(synk): the multi-class branch of DatanodeCMMetric only forwards
        # raw labels/preds + class names (no tensor compute); not a kernel.
        # For many classes, stack them as a (C, rows, 128) slab with a leading
        # 'parallel' class axis and a (C, 3, 128) output in one pallas_call.
        # TODO(synk): on v5e/v6e the per-lane column sums could be offloaded to
        # the (idle) int8 MXU via an all-ones row dot; not portable to v7x.
        return calc_tp_fp_tn_fn_for_single_class(
            labels, preds,
            min_pallas_elements=self.min_pallas_elements,
            max_tile_rows=self.max_tile_rows)

    __call__ = forward


if __name__ == "__main__":
    key = jax.random.PRNGKey(0)
    k1, k2, k3, k4 = jax.random.split(key, 4)

    def ref_counts(labels, preds):
        # Mirrors the reference Python loop semantics for 0/1 inputs.
        y = jnp.asarray(labels).reshape(-1).astype(jnp.int32)
        p = jnp.asarray(preds).reshape(-1).astype(jnp.int32)
        return {
            "TP": int(jnp.sum((y == p) & (y == 1))),
            "TN": int(jnp.sum((y == p) & (y == 0))),
            "FN": int(jnp.sum((y != p) & (y == 1))),
            "FP": int(jnp.sum((y != p) & (y == 0))),
        }

    # Force the Pallas path (demo sizes are below the fallback threshold).
    metric = DatanodeCMMetricPallas(inferType="ILP", min_pallas_elements=0)

    # Case 1: small int8 sequence -> single-block kernel, no masking.
    n1 = 128
    labels1 = jax.random.bernoulli(k1, 0.5, (n1,)).astype(jnp.int8)
    preds1 = jax.random.bernoulli(k2, 0.5, (n1,)).astype(jnp.int8)
    out1 = jax.block_until_ready(metric(labels1, preds1))
    ref1 = ref_counts(labels1, preds1)
    for k in ("TP", "FP", "TN", "FN"):
        assert int(out1[k]) == ref1[k], (k, int(out1[k]), ref1[k])
    assert sum(ref1.values()) == n1

    # Case 2: ragged int32 sequence with small tiles -> multi-block grid with a
    # masked ragged last block (exercises the pipelined / masked path).
    n2 = 6000
    labels2 = jax.random.bernoulli(k3, 0.4, (n2,)).astype(jnp.int32)
    preds2 = jax.random.bernoulli(k4, 0.6, (n2,)).astype(jnp.int32)
    metric_small_tiles = DatanodeCMMetricPallas(
        inferType="ILP", min_pallas_elements=0, max_tile_rows=32)
    out2 = jax.block_until_ready(metric_small_tiles(labels2, preds2))
    ref2 = ref_counts(labels2, preds2)
    for k in ("TP", "FP", "TN", "FN"):
        assert int(out2[k]) == ref2[k], (k, int(out2[k]), ref2[k])
    assert sum(ref2.values()) == n2

    print("KERNEL_OK")
</pallas_src>

<mosaic_0001>
module attributes {stable_mosaic.version = 11 : i64} {
  func.func @kernel(%arg0: i32, %arg1: memref<1x128xi8, #tpu.memory_space<vmem>>, %arg2: memref<1x128xi8, #tpu.memory_space<vmem>>, %arg3: memref<1x3x128xi32, #tpu.memory_space<vmem>>) attributes {dimension_semantics = [#tpu.dimension_semantics<parallel>], iteration_bounds = array<i64: 1>, scalar_prefetch = 0 : i64, scratch_operands = 0 : i64, tpu.core_type = #tpu.core_type<tc>, window_params = [{transform_indices = @transform_0, window_bounds = array<i64: 1, 128>}, {transform_indices = @transform_1, window_bounds = array<i64: 1, 128>}, {transform_indices = @transform_2, window_bounds = array<i64: 1, 3, 128>}]} {
    %c0 = arith.constant 0 : index
    %c0_0 = arith.constant 0 : index
    %0 = vector.load %arg1[%c0, %c0_0] : memref<1x128xi8, #tpu.memory_space<vmem>>, vector<1x128xi8>
    %c0_1 = arith.constant 0 : index
    %c0_2 = arith.constant 0 : index
    %1 = vector.load %arg2[%c0_1, %c0_2] : memref<1x128xi8, #tpu.memory_space<vmem>>, vector<1x128xi8>
    %2 = arith.andi %0, %1 : vector<1x128xi8>
    %3 = arith.extsi %0 : vector<1x128xi8> to vector<1x128xi32>
    %cst = arith.constant dense<0> : vector<128xi32>
    %4 = vector.multi_reduction <add>, %3, %cst [0] : vector<1x128xi32> to vector<128xi32>
    %5 = vector.shape_cast %4 : vector<128xi32> to vector<1x128xi32>
    %c0_3 = arith.constant 0 : index
    %c0_4 = arith.constant 0 : index
    %c0_5 = arith.constant 0 : index
    %6 = vector.load %arg3[%c0_3, %c0_4, %c0_5] : memref<1x3x128xi32, #tpu.memory_space<vmem>>, vector<1x1x128xi32>
    %7 = vector.shape_cast %6 : vector<1x1x128xi32> to vector<1x128xi32>
    %8 = vector.shape_cast %5 : vector<1x128xi32> to vector<1x1x128xi32>
    tpu.vector_store %arg3[%c0_3, %c0_4, %c0_5], %8 {strides = array<i32>} : memref<1x3x128xi32, #tpu.memory_space<vmem>>, vector<1x1x128xi32>,
    %9 = arith.extsi %1 : vector<1x128xi8> to vector<1x128xi32>
    %cst_6 = arith.constant dense<0> : vector<128xi32>
    %10 = vector.multi_reduction <add>, %9, %cst_6 [0] : vector<1x128xi32> to vector<128xi32>
    %11 = vector.shape_cast %10 : vector<128xi32> to vector<1x128xi32>
    %c0_7 = arith.constant 0 : index
    %c1 = arith.constant 1 : index
    %c0_8 = arith.constant 0 : index
    %12 = vector.load %arg3[%c0_7, %c1, %c0_8] : memref<1x3x128xi32, #tpu.memory_space<vmem>>, vector<1x1x128xi32>
    %13 = vector.shape_cast %12 : vector<1x1x128xi32> to vector<1x128xi32>
    %14 = vector.shape_cast %11 : vector<1x128xi32> to vector<1x1x128xi32>
    tpu.vector_store %arg3[%c0_7, %c1, %c0_8], %14 {strides = array<i32>} : memref<1x3x128xi32, #tpu.memory_space<vmem>>, vector<1x1x128xi32>,
    %15 = arith.extsi %2 : vector<1x128xi8> to vector<1x128xi32>
    %cst_9 = arith.constant dense<0> : vector<128xi32>
    %16 = vector.multi_reduction <add>, %15, %cst_9 [0] : vector<1x128xi32> to vector<128xi32>
    %17 = vector.shape_cast %16 : vector<128xi32> to vector<1x128xi32>
    %c0_10 = arith.constant 0 : index
    %c2 = arith.constant 2 : index
    %c0_11 = arith.constant 0 : index
    %18 = vector.load %arg3[%c0_10, %c2, %c0_11] : memref<1x3x128xi32, #tpu.memory_space<vmem>>, vector<1x1x128xi32>
    %19 = vector.shape_cast %18 : vector<1x1x128xi32> to vector<1x128xi32>
    %20 = vector.shape_cast %17 : vector<1x128xi32> to vector<1x1x128xi32>
    tpu.vector_store %arg3[%c0_10, %c2, %c0_11], %20 {strides = array<i32>} : memref<1x3x128xi32, #tpu.memory_space<vmem>>, vector<1x1x128xi32>,
    return
  }
  func.func @transform_0(%arg0: i32) -> (i32, i32) {
    %c0_i32 = arith.constant 0 : i32
    %c0_i32_0 = arith.constant 0 : i32
    return %arg0, %c0_i32 : i32, i32
  }
  func.func @transform_1(%arg0: i32) -> (i32, i32) {
    %c0_i32 = arith.constant 0 : i32
    %c0_i32_0 = arith.constant 0 : i32
    return %arg0, %c0_i32 : i32, i32
  }
  func.func @transform_2(%arg0: i32) -> (i32, i32, i32) {
    %c0_i32 = arith.constant 0 : i32
    %c0_i32_0 = arith.constant 0 : i32
    %c0_i32_1 = arith.constant 0 : i32
    return %arg0, %c0_i32, %c0_i32_0 : i32, i32, i32
  }
}

</mosaic_0001>

<llo_original>
// kernel: tpu_custom_call.1
$region0: #{tpu_custom_call.1}
  #allocation0 [shape = 'u32[]', space=smem, size = 0x4, offset = 0x4, fixed_abs, tag = 'smem constant byte address 0x4 - core index']
  #allocation1 [shape = 'u32[144,128]{1,0:T(1,128)}', space=vmem, size = 0x12000, scoped, tag = 'internal scratch']
  %s0 = inlined_call_operand.hbm [shape: s8[1,128], index: 0, kind: input, shape index: {}]
  %s1 = inlined_call_operand.vmem [shape: s8[1,128], index: 1, kind: input, shape index: {}]
  %s2 = inlined_call_operand.vmem [shape: s32[1,3,128], index: 2, kind: output, shape index: {}]
  %s3 = sld [smem:[#allocation0]]
  $region22: #{tpu_custom_call.1} parent=0
    _
  %s5 = ssub.s32 1, %s3
  %s6 = scalar_select 0, %s5, %s3
  $region1: #{tpu_custom_call.1} parent=0
    #allocation2 [shape = 'u8[512]{0}', space=vmem, size = 0x400, scoped, tag = 'input window, operand 0, single buffered']
    #allocation3 [shape = 's32[1]{0}', space=sflag, size = 0x4, scoped, tag = 'scoped memory for tpu_custom_call.1']
    %7 = vsyncpa [#allocation3], 0
    // Predicated region
    $region2: #{tpu_custom_call.1} parent=1 // pred_check
      _
    $region3: #{tpu_custom_call.1} parent=1 // pred_check_branch
      %9 = sbr.rel (0) target = $region5
    $region4: #{tpu_custom_call.1} parent=1 // pred_region
      %s11 = ssub.s32 16, 16
      %12 = vsyncadd [#allocation3], %s11
      %s14 = sshll.u32 [#allocation2], 4
      %s15 = int_to_ptr.vmem [resolvable:$true] %s14
      %17 = dma.hbm_to_vmem [thread:$0]  %s0, 16, %s15, [#allocation3]
    $region5: #{tpu_custom_call.1} parent=1 // pred_fallthru
      _
    // Predicated region
    $region6: #{tpu_custom_call.1} parent=1 // pred_check
      _
    $region7: #{tpu_custom_call.1} parent=1 // pred_check_branch
      %19 = sbr.rel (0) target = $region9
    $region8: #{tpu_custom_call.1} parent=1 // pred_region
      _
    $region9: #{tpu_custom_call.1} parent=1 // pred_fallthru
      _
    // Predicated region
    $region10: #{tpu_custom_call.1} parent=1 // pred_check
      _
    $region11: #{tpu_custom_call.1} parent=1 // pred_check_branch
      %21 = sbr.rel (0) target = $region13
    $region12: #{tpu_custom_call.1} parent=1 // pred_region
      %22 = dma.done [#allocation3], 16
    $region13: #{tpu_custom_call.1} parent=1 // pred_fallthru
      _
    %v23 = vld [vmem:[#allocation2] sm:$0x1]
    %v24 = vld [vmem:[%s1] sm:$0x1]
    %v25 = vand.u32 %v23, %v24
    %v26 = vunpack.c.0.s8 %v23
    %27 = vst [vmem:[%s2] sm:$0x1] %v26
    %v28 = vunpack.c.0.s8 %v24
    %29 = vst [vmem:[%s2 + $0x1] sm:$0x1] %v28
    %v30 = vunpack.c.0.s8 %v25
    %31 = vst [vmem:[%s2 + $0x2] sm:$0x1] %v30
    // Predicated region
    $region14: #{tpu_custom_call.1} parent=1 // pred_check
      _
    $region15: #{tpu_custom_call.1} parent=1 // pred_check_branch
      %33 = sbr.rel (0) target = $region17
    $region16: #{tpu_custom_call.1} parent=1 // pred_region
      _
    $region17: #{tpu_custom_call.1} parent=1 // pred_fallthru
      _
    // Predicated region
    $region18: #{tpu_custom_call.1} parent=1 // pred_check
      _
    $region19: #{tpu_custom_call.1} parent=1 // pred_check_branch
      %35 = sbr.rel (0) target = $region21
    $region20: #{tpu_custom_call.1} parent=1 // pred_region
      _
    $region21: #{tpu_custom_call.1} parent=1 // pred_fallthru
      _
    %36 = vsyncpa [#allocation3], 1

</llo_original>
